<compile_context>
chip_gen: v7x
topology: tpu7x:2x2x1
jax: 0.10.0
libtpu: 0.0.40
codegen_flags: <defaults>
</compile_context>

<pallas_src>
import functools

import jax
import jax.numpy as jnp
from jax import lax
from jax.experimental import pallas as pl
from jax.experimental.pallas import tpu as pltpu

_MIB = 1024 * 1024


def _vmem_capacity_bytes():
    """Physical VMEM per TensorCore; conservative (v7x) fallback if unqueryable."""
    try:
        cap = int(pltpu.get_tpu_info().vmem_capacity_bytes)
        if cap > 0:
            return cap
    except Exception:
        pass
    return 64 * _MIB


def _pooler_kernel(x_ref, w_ref, b_ref, o_ref, *, precision):
    """One D_out tile of tanh(x @ W_T + b).

    x_ref: (B, D_in)    first-token activations, resident across the grid
    w_ref: (D_in, TN)   weight tile, already in (in, out) layout (no transpose here)
    b_ref: (1, TN)      bias tile
    o_ref: (B, TN)      output tile (lane-dense stores)
    """
    x = x_ref[...]
    w = w_ref[...]
    # If the weight is streamed narrower than the activations (bf16 streaming),
    # run the MXU matmul in the narrow dtype; accumulate in f32 either way.
    if jnp.dtype(w.dtype).itemsize < jnp.dtype(x.dtype).itemsize:
        x = x.astype(w.dtype)
    elif jnp.dtype(x.dtype).itemsize < jnp.dtype(w.dtype).itemsize:
        w = w.astype(x.dtype)
    y = lax.dot_general(
        x, w,
        dimension_numbers=(((1,), (0,)), ((), ())),   # canonical contraction
        preferred_element_type=jnp.float32,
        precision=precision,
    )
    y = y + b_ref[...].astype(jnp.float32)
    o_ref[...] = jnp.tanh(y).astype(o_ref.dtype)


def _choose_tn(d_out, d_in, w_itemsize, double_buf_budget):
    """Pick the D_out tile width.

    Prefers lane-aligned divisors of d_out capped at d_out//2 (so grid_n >= 2:
    v7x 2-TC split + prefetch/compute overlap), taking the largest one whose
    double-buffered weight tile fits the budget (keeps tiles >= ~1 MiB for
    realistic BERT sizes instead of degenerating to 128)."""
    aligned = [t for t in range(128, d_out + 1, 128) if d_out % t == 0]
    aligned.sort(reverse=True)
    if not aligned:
        return d_out                       # tiny / non-lane-aligned D: one full block
    split = [t for t in aligned if 2 * t <= d_out]   # candidates giving grid_n >= 2
    cands = split if split else aligned
    for tn in cands:
        if 2 * tn * d_in * w_itemsize <= double_buf_budget:
            return tn
    return cands[-1]


def bert_final_pooler(hidden_states, weight, bias, *,
                      weight_layout="oi",
                      stream_weights_in_bf16=False,
                      precision=None,
                      weight_buffers=2):
    """tanh(hidden_states[:, 0] @ W.T + b).

    hidden_states: (B, S, D)
    weight:        (D, D). weight_layout="oi" (default) is the PyTorch (out, in)
                   layout; "io" means the caller already pre-transposed to (in, out)
                   (preferred for repeated calls — avoids a per-call transpose).
    bias:          (D,)
    stream_weights_in_bf16: halve weight HBM traffic (~2x on this memory-bound op);
                   f32 accumulation / f32 tanh, slight numeric change.
    precision:     lax.Precision for the MXU; None -> HIGHEST for small-batch f32
                   (PyTorch parity), DEFAULT otherwise.
    weight_buffers: pipeline depth for the weight stream (v7x knob; 3 keeps the HBM
                   pipe full across step boundaries once grid_n >= 4).
    """
    B, S, D = hidden_states.shape
    assert weight.shape == (D, D) and bias.shape == (D,)
    assert weight_layout in ("oi", "io")

    # TODO(synk): fold the seq-0 slice into the pallas_call (Squeezed seq dim); kept
    # in the wrapper since its B*D bytes are negligible next to the D*D weight stream.
    first_token = hidden_states[:, 0, :]

    # Present the weight in (D_in, D_out) layout so the kernel contraction is
    # canonical (no per-step in-kernel transpose of a multi-MiB tile).
    w_stream = weight.T if weight_layout == "oi" else weight
    if stream_weights_in_bf16 and w_stream.dtype == jnp.float32:
        w_stream = w_stream.astype(jnp.bfloat16)
    b2 = bias.reshape(1, D)

    w_itemsize = jnp.dtype(w_stream.dtype).itemsize
    x_itemsize = jnp.dtype(first_token.dtype).itemsize
    b_itemsize = jnp.dtype(b2.dtype).itemsize
    out_dtype = hidden_states.dtype
    out_itemsize = jnp.dtype(out_dtype).itemsize

    # Generation-aware budgeting (v7x: 64 MiB/TC; v5e/v6e: 128 MiB).
    vmem_cap = _vmem_capacity_bytes()
    double_buf_budget = vmem_cap // 3            # weight double-buffer share of VMEM
    TN = _choose_tn(D, D, w_itemsize, double_buf_budget)
    grid_n = D // TN
    n_wbuf = weight_buffers if (weight_buffers > 2 and grid_n >= 4) else 2

    # VMEM usage: multi-buffered weight/bias/out tiles + resident x + f32 temporaries.
    tile_bytes = (
        n_wbuf * D * TN * w_itemsize             # weight tiles (dominant term)
        + 2 * TN * b_itemsize                    # bias tiles
        + 2 * B * TN * out_itemsize              # output tiles
        + 2 * B * D * x_itemsize                 # resident first-token block
        + 3 * B * TN * 4                         # f32 acc / bias-add / tanh temporaries
    )
    # Clamp well below physical VMEM (headroom for Mosaic internal scratch), never
    # below the default scoped limit.
    vmem_limit = int(min(vmem_cap - 16 * _MIB, max(32 * _MIB, 2 * tile_bytes)))

    if precision is None:
        if (first_token.dtype == jnp.float32 and w_stream.dtype == jnp.float32
                and B <= 128):
            precision = lax.Precision.HIGHEST    # PyTorch f32 parity (multi-pass bf16)
        else:
            precision = lax.Precision.DEFAULT    # keeps large-B / bf16 memory-bound

    w_spec_kwargs = {}
    if n_wbuf != 2:
        w_spec_kwargs["pipeline_mode"] = pl.Buffered(n_wbuf)

    out = pl.pallas_call(
        functools.partial(_pooler_kernel, precision=precision),
        out_shape=jax.ShapeDtypeStruct((B, D), out_dtype),
        grid_spec=pltpu.PrefetchScalarGridSpec(
            num_scalar_prefetch=0,
            grid=(grid_n,),
            in_specs=[
                pl.BlockSpec((B, D), lambda j: (0, 0)),                    # x resident
                pl.BlockSpec((D, TN), lambda j: (0, j), **w_spec_kwargs),  # weight stream
                pl.BlockSpec((1, TN), lambda j: (0, j)),                   # bias tile
            ],
            out_specs=pl.BlockSpec((B, TN), lambda j: (0, j)),
        ),
        compiler_params=pltpu.CompilerParams(
            dimension_semantics=("parallel",),
            vmem_limit_bytes=vmem_limit,
        ),
    )(first_token, w_stream, b2)
    return out


def _reference(hidden_states, weight, bias):
    x = hidden_states[:, 0, :]
    y = jnp.dot(x, weight.T, precision=lax.Precision.HIGHEST)
    return jnp.tanh(y + bias)


def _make_inputs(key, B, S, D, dtype=jnp.float32):
    k1, k2, k3 = jax.random.split(key, 3)
    hidden_states = jax.random.normal(k1, (B, S, D), dtype=dtype)
    bound = 1.0 / jnp.sqrt(jnp.float32(D))
    weight = jax.random.uniform(k2, (D, D), minval=-bound, maxval=bound, dtype=jnp.float32)
    bias = jax.random.uniform(k3, (D,), minval=-bound, maxval=bound, dtype=jnp.float32)
    return hidden_states, weight, bias


if __name__ == "__main__":
    key = jax.random.PRNGKey(0)

    # Case 1: small shapes consistent with the module (batch=2, seq=8, hidden=32, n=1).
    B, S, D = 2, 8, 32
    hs, w, b = _make_inputs(key, B, S, D)
    out = jax.block_until_ready(bert_final_pooler(hs, w, b))
    ref = _reference(hs, w, b)
    assert out.shape == (B, D)
    assert jnp.allclose(out, ref, atol=1e-5, rtol=1e-5), float(jnp.max(jnp.abs(out - ref)))

    # Case 2: lane-divisible D exercises the grid_n >= 2 (split-weight-stream) path.
    B2, S2, D2 = 2, 8, 256
    hs2, w2, b2 = _make_inputs(jax.random.PRNGKey(1), B2, S2, D2)
    out2 = jax.block_until_ready(bert_final_pooler(hs2, w2, b2))
    ref2 = _reference(hs2, w2, b2)
    assert out2.shape == (B2, D2)
    assert jnp.allclose(out2, ref2, atol=1e-5, rtol=1e-5), float(jnp.max(jnp.abs(out2 - ref2)))

    # Case 3: bf16 weight-streaming path (numerics intentionally relaxed).
    out3 = jax.block_until_ready(
        bert_final_pooler(hs2, w2, b2, stream_weights_in_bf16=True))
    assert out3.shape == (B2, D2)
    assert jnp.allclose(out3, ref2, atol=5e-2, rtol=5e-2), float(jnp.max(jnp.abs(out3 - ref2)))

    print("KERNEL_OK")
</pallas_src>

<mosaic_0001>
module attributes {stable_mosaic.version = 11 : i64} {
  func.func @_pooler_kernel(%arg0: i32, %arg1: memref<2x32xf32, #tpu.memory_space<vmem>>, %arg2: memref<32x32xf32, #tpu.memory_space<vmem>>, %arg3: memref<1x32xf32, #tpu.memory_space<vmem>>, %arg4: memref<2x32xf32, #tpu.memory_space<vmem>>) attributes {dimension_semantics = [#tpu.dimension_semantics<parallel>], iteration_bounds = array<i64: 1>, scalar_prefetch = 0 : i64, scratch_operands = 0 : i64, tpu.core_type = #tpu.core_type<tc>, window_params = [{pipeline_mode = #tpu.pipeline_mode<synchronous>, transform_indices = @transform_0, window_bounds = array<i64: 2, 32>}, {transform_indices = @transform_1, window_bounds = array<i64: 32, 32>}, {transform_indices = @transform_2, window_bounds = array<i64: 1, 32>}, {transform_indices = @transform_3, window_bounds = array<i64: 2, 32>}]} {
    %c0 = arith.constant 0 : index
    %c0_0 = arith.constant 0 : index
    %0 = vector.load %arg1[%c0, %c0_0] : memref<2x32xf32, #tpu.memory_space<vmem>>, vector<2x32xf32>
    %c0_1 = arith.constant 0 : index
    %c0_2 = arith.constant 0 : index
    %1 = vector.load %arg2[%c0_1, %c0_2] : memref<32x32xf32, #tpu.memory_space<vmem>>, vector<32x32xf32>
    %cst = arith.constant dense<0.000000e+00> : vector<2x32xf32>
    %2 = tpu.matmul %0, %1, %cst {dimension_numbers = #tpu.dot_dimension_numbers<[1], [0], [0], [1], [0, 0, 1, 1], [], []>, precision = #tpu.contract_precision<fp32>} : vector<2x32xf32>, vector<32x32xf32>, vector<2x32xf32> -> vector<2x32xf32>
    %c0_3 = arith.constant 0 : index
    %c0_4 = arith.constant 0 : index
    %3 = vector.load %arg3[%c0_3, %c0_4] : memref<1x32xf32, #tpu.memory_space<vmem>>, vector<1x32xf32>
    %4 = vector.broadcast %3 : vector<1x32xf32> to vector<2x32xf32>
    %5 = arith.addf %2, %4 : vector<2x32xf32>
    %6 = math.tanh %5 : vector<2x32xf32>
    %c0_5 = arith.constant 0 : index
    %c0_6 = arith.constant 0 : index
    %7 = vector.load %arg4[%c0_5, %c0_6] : memref<2x32xf32, #tpu.memory_space<vmem>>, vector<2x32xf32>
    tpu.vector_store %arg4[%c0_5, %c0_6], %6 {strides = array<i32>} : memref<2x32xf32, #tpu.memory_space<vmem>>, vector<2x32xf32>,
    return
  }
  func.func @transform_0(%arg0: i32) -> (i32, i32) {
    %c0_i32 = arith.constant 0 : i32
    %c0_i32_0 = arith.constant 0 : i32
    %c0_i32_1 = arith.constant 0 : i32
    return %c0_i32, %c0_i32_0 : i32, i32
  }
  func.func @transform_1(%arg0: i32) -> (i32, i32) {
    %c0_i32 = arith.constant 0 : i32
    %c0_i32_0 = arith.constant 0 : i32
    return %c0_i32, %arg0 : i32, i32
  }
  func.func @transform_2(%arg0: i32) -> (i32, i32) {
    %c0_i32 = arith.constant 0 : i32
    %c0_i32_0 = arith.constant 0 : i32
    return %c0_i32, %arg0 : i32, i32
  }
  func.func @transform_3(%arg0: i32) -> (i32, i32) {
    %c0_i32 = arith.constant 0 : i32
    %c0_i32_0 = arith.constant 0 : i32
    return %c0_i32, %arg0 : i32, i32
  }
}

</mosaic_0001>

<llo_original>
// kernel: tpu_custom_call.1
$region0: #{tpu_custom_call.1}
  #allocation0 [shape = 'u32[]', space=smem, size = 0x4, offset = 0x4, fixed_abs, tag = 'smem constant byte address 0x4 - core index']
  #allocation1 [shape = 'u32[144,128]{1,0:T(1,128)}', space=vmem, size = 0x12000, scoped, tag = 'internal scratch']
  %s0 = inlined_call_operand.hbm [shape: f32[2,32], index: 0, kind: input, shape index: {}]
  %s1 = inlined_call_operand.hbm [shape: f32[32,32], index: 1, kind: input, shape index: {}]
  %s2 = inlined_call_operand.vmem [shape: f32[1,32], index: 2, kind: input, shape index: {}]
  %s3 = inlined_call_operand.hbm [shape: f32[2,32], index: 3, kind: output, shape index: {}]
  %s4 = sld [smem:[#allocation0]]
  $region30: #{tpu_custom_call.1} parent=0
    _
  %s6 = ssub.s32 1, %s4
  %s7 = scalar_select 0, %s6, %s4
  $region1: #{tpu_custom_call.1} parent=0
    #allocation2 [shape = 'u8[1024]{0}', space=vmem, size = 0x400, scoped, tag = 'input window, operand 0, single buffered']
    #allocation3 [shape = 's32[1]{0}', space=sflag, size = 0x4, scoped, tag = 'scoped memory for tpu_custom_call.1']
    #allocation4 [shape = 's32[1]{0}', space=sflag, size = 0x4, scoped, tag = 'scoped memory for tpu_custom_call.1']
    #allocation5 [shape = 'u8[16384]{0}', space=vmem, size = 0x4000, scoped, tag = 'input window, operand 1, single buffered']
    #allocation6 [shape = 's32[1]{0}', space=sflag, size = 0x4, scoped, tag = 'scoped memory for tpu_custom_call.1']
    #allocation7 [shape = 'u8[1024]{0}', space=vmem, size = 0x400, scoped, tag = 'output window, operand 0, single buffered']
    %8 = vsyncpa [#allocation3], 0
    %9 = vsyncpa [#allocation6], 0
    %10 = vsyncpa [#allocation4], 0
    // Predicated region
    $region2: #{tpu_custom_call.1} parent=1 // pred_check
      _
    $region3: #{tpu_custom_call.1} parent=1 // pred_check_branch
      %12 = sbr.rel (0) target = $region5
    $region4: #{tpu_custom_call.1} parent=1 // pred_region
      %s14 = ssub.s32 32, 32
      %15 = vsyncadd [#allocation3], %s14
      %s17 = sshll.u32 [#allocation2], 4
      %s18 = int_to_ptr.vmem [resolvable:$true] %s17
      %20 = dma.hbm_to_vmem [thread:$0]  %s0, 32, %s18, [#allocation3]
    $region5: #{tpu_custom_call.1} parent=1 // pred_fallthru
      _
    // Predicated region
    $region6: #{tpu_custom_call.1} parent=1 // pred_check
      _
    $region7: #{tpu_custom_call.1} parent=1 // pred_check_branch
      %22 = sbr.rel (0) target = $region9
    $region8: #{tpu_custom_call.1} parent=1 // pred_region
      %s24 = ssub.s32 512, 512
      %25 = vsyncadd [#allocation6], %s24
      %s26 = sshll.u32 [#allocation5], 4
      %s27 = int_to_ptr.vmem [resolvable:$true] %s26
      %32 = dma.hbm_to_vmem [thread:$0]  %s1, 512, %s27, [#allocation6], 128, 128, 8
    $region9: #{tpu_custom_call.1} parent=1 // pred_fallthru
      _
    // Predicated region
    $region10: #{tpu_custom_call.1} parent=1 // pred_check
      _
    $region11: #{tpu_custom_call.1} parent=1 // pred_check_branch
      %34 = sbr.rel (0) target = $region13
    $region12: #{tpu_custom_call.1} parent=1 // pred_region
      _
    $region13: #{tpu_custom_call.1} parent=1 // pred_fallthru
      _
    // Predicated region
    $region14: #{tpu_custom_call.1} parent=1 // pred_check
      _
    $region15: #{tpu_custom_call.1} parent=1 // pred_check_branch
      %36 = sbr.rel (0) target = $region17
    $region16: #{tpu_custom_call.1} parent=1 // pred_region
      %37 = dma.done [#allocation3], 32
    $region17: #{tpu_custom_call.1} parent=1 // pred_fallthru
      _
    // Predicated region
    $region18: #{tpu_custom_call.1} parent=1 // pred_check
      _
    $region19: #{tpu_custom_call.1} parent=1 // pred_check_branch
      %39 = sbr.rel (0) target = $region21
    $region20: #{tpu_custom_call.1} parent=1 // pred_region
      %40 = dma.done [#allocation6], 512
    $region21: #{tpu_custom_call.1} parent=1 // pred_fallthru
      _
    %v41 = vld [vmem:[#allocation2] sm:$0x3]
    %v42 = vld [vmem:[#allocation5] sm:$0xff]
    %v43 = vld [vmem:[#allocation5 + $0x8] sm:$0xff]
    %v44 = vld [vmem:[#allocation5 + $0x10] sm:$0xff]
    %v45 = vld [vmem:[#allocation5 + $0x18] sm:$0xff]
    %v46 = vld [vmem:[%s2] sm:$0x1]
    %v48 = vlaneseq
    %v49 = vshrl.u32 %v48, 7
    %v50 = vsub.s32 0, %v49
    %v51 = vrot.slane %v46, %v50
    %vm53 = vcmask 261120
    %v55 = vsel %vm53, %v41, 0
    %57 = vmatprep.subr.mxu0 0.0
    %v58 = vand.u32 %v42, 4294901760
    %59 = vmatpush1.msra.mxu0 %v58
    %60 = vmatprep.subr.mxu0 0.0
    %v61 = vand.u32 %v43, 4294901760
    %62 = vmatpush1.msra.mxu0 %v61
    %63 = vmatprep.subr.mxu0 0.0
    %v64 = vand.u32 %v44, 4294901760
    %65 = vmatpush1.msra.mxu0 %v64
    %66 = vmatprep.subr.mxu0 0.0
    %v67 = vand.u32 %v45, 4294901760
    %68 = vmatpush1.msra.mxu0 %v67
    %69 = vmatprep.subr.mxu0 0.0
    %70 = vmatpush1.msra.mxu0 0.0
    %71 = vmatprep.subr.mxu0 0.0
    %72 = vmatpush1.msra.mxu0 0.0
    %73 = vmatprep.subr.mxu0 0.0
    %74 = vmatpush1.msra.mxu0 0.0
    %75 = vmatprep.subr.mxu0 0.0
    %76 = vmatpush1.msra.mxu0 0.0
    %77 = vmatprep.subr.mxu0 0.0
    %78 = vmatpush1.msra.mxu0 0.0
    %79 = vmatprep.subr.mxu0 0.0
    %80 = vmatpush1.msra.mxu0 0.0
    %81 = vmatprep.subr.mxu0 0.0
    %82 = vmatpush1.msra.mxu0 0.0
    %83 = vmatprep.subr.mxu0 0.0
    %84 = vmatpush1.msra.mxu0 0.0
    %85 = vmatprep.subr.mxu0 0.0
    %86 = vmatpush1.msra.mxu0 0.0
    %87 = vmatprep.subr.mxu0 0.0
    %88 = vmatpush1.msra.mxu0 0.0
    %89 = vmatprep.subr.mxu0 0.0
    %90 = vmatpush1.msra.mxu0 0.0
    %91 = vmatprep.subr.mxu0 0.0
    %92 = vmatpush1.msra.mxu0 0.0
    %93 = vmatprep.subr.mxu0 0.0
    %94 = vmatpush1.msra.mxu0 0.0
    %95 = vmatprep.subr.mxu0 0.0
    %96 = vmatpush1.msra.mxu0 0.0
    %97 = vmatprep.subr.mxu0 0.0
    %98 = vmatpush1.msra.mxu0 0.0
    %99 = vmatprep.subr.mxu0 0.0
    %100 = vmatpush1.msra.mxu0 0.0
    %101 = vmatprep.subr.mxu0 0.0
    %102 = vmatpush1.msra.mxu0 0.0
    %103 = vmatprep.subr.mxu0 0.0
    %104 = vmatpush1.msra.mxu0 0.0
    %105 = vmatprep.subr.mxu0 0.0
    %106 = vmatpush1.msra.mxu0 0.0
    %107 = vmatprep.subr.mxu0 0.0
    %108 = vmatpush1.msra.mxu0 0.0
    %109 = vmatprep.subr.mxu0 0.0
    %110 = vmatpush1.msra.mxu0 0.0
    %111 = vmatprep.subr.mxu0 0.0
    %112 = vmatpush1.msra.mxu0 0.0
    %113 = vmatprep.subr.mxu0 0.0
    %114 = vmatpush1.msra.mxu0 0.0
    %115 = vmatprep.subr.mxu0 0.0
    %116 = vmatpush1.msra.mxu0 0.0
    %117 = vmatprep.subr.mxu0 0.0
    %118 = vmatpush1.msra.mxu0 0.0
    %119 = vmatprep.subr.mxu0 0.0
    %120 = vmatpush1.msra.mxu0 0.0
    %121 = vmatprep.subr.mxu0 0.0
    %122 = vmatpush1.msra.mxu0 0.0
    %123 = vmatprep.subr.mxu0 0.0
    %124 = vmatpush1.msra.mxu0 0.0
    %125 = vmatprep.mubr.f32.mxu0 0.0
    %v126 = vand.u32 %v55, 4294901760
    %v127 = vsub.f32 %v55, %v126
    %v128 = vand.u32 %v127, 4294901760
    %v129 = vsub.f32 %v127, %v128
    %v130 = vand.u32 %v129, 4294901760
    %131 = vmatmul.mubr.f32.gmra.mrb[0].mxu0 %v130
    %v132 = vpop.f32.mrb[0].mxu0
    %v133 = vadd.f32 %v51, %v132
    %v134 = vpop.f32.mrb[0].mxu0
    %135 = vdwg.mxu0
    %136 = vmatprep.subr.mxu0 0.0
    %v137 = vand.u32 %v42, 4294901760
    %v138 = vsub.f32 %v42, %v137
    %v139 = vand.u32 %v138, 4294901760
    %v140 = vsub.f32 %v138, %v139
    %v141 = vand.u32 %v140, 4294901760
    %142 = vmatpush1.msra.mxu0 %v141
    %143 = vmatprep.subr.mxu0 0.0
    %v144 = vand.u32 %v43, 4294901760
    %v145 = vsub.f32 %v43, %v144
    %v146 = vand.u32 %v145, 4294901760
    %v147 = vsub.f32 %v145, %v146
    %v148 = vand.u32 %v147, 4294901760
    %149 = vmatpush1.msra.mxu0 %v148
    %150 = vmatprep.subr.mxu0 0.0
    %v151 = vand.u32 %v44, 4294901760
    %v152 = vsub.f32 %v44, %v151
    %v153 = vand.u32 %v152, 4294901760
    %v154 = vsub.f32 %v152, %v153
    %v155 = vand.u32 %v154, 4294901760
    %156 = vmatpush1.msra.mxu0 %v155
    %157 = vmatprep.subr.mxu0 0.0
    %v158 = vand.u32 %v45, 4294901760
    %v159 = vsub.f32 %v45, %v158
    %v160 = vand.u32 %v159, 4294901760
    %v161 = vsub.f32 %v159, %v160
    %v162 = vand.u32 %v161, 4294901760
    %163 = vmatpush1.msra.mxu0 %v162
    %164 = vmatprep.subr.mxu0 0.0
    %165 = vmatpush1.msra.mxu0 0.0
    %166 = vmatprep.subr.mxu0 0.0
    %167 = vmatpush1.msra.mxu0 0.0
    %168 = vmatprep.subr.mxu0 0.0
    %169 = vmatpush1.msra.mxu0 0.0
    %170 = vmatprep.subr.mxu0 0.0
    %171 = vmatpush1.msra.mxu0 0.0
    %172 = vmatprep.subr.mxu0 0.0
    %173 = vmatpush1.msra.mxu0 0.0
    %174 = vmatprep.subr.mxu0 0.0
    %175 = vmatpush1.msra.mxu0 0.0
    %176 = vmatprep.subr.mxu0 0.0
    %177 = vmatpush1.msra.mxu0 0.0
    %178 = vmatprep.subr.mxu0 0.0
    %179 = vmatpush1.msra.mxu0 0.0
    %180 = vmatprep.subr.mxu0 0.0
    %181 = vmatpush1.msra.mxu0 0.0
    %182 = vmatprep.subr.mxu0 0.0
    %183 = vmatpush1.msra.mxu0 0.0
    %184 = vmatprep.subr.mxu0 0.0
    %185 = vmatpush1.msra.mxu0 0.0
    %186 = vmatprep.subr.mxu0 0.0
    %187 = vmatpush1.msra.mxu0 0.0
    %188 = vmatprep.subr.mxu0 0.0
    %189 = vmatpush1.msra.mxu0 0.0
    %190 = vmatprep.subr.mxu0 0.0
    %191 = vmatpush1.msra.mxu0 0.0
    %192 = vmatprep.subr.mxu0 0.0
    %193 = vmatpush1.msra.mxu0 0.0
    %194 = vmatprep.subr.mxu0 0.0
    %195 = vmatpush1.msra.mxu0 0.0
    %196 = vmatprep.subr.mxu0 0.0
    %197 = vmatpush1.msra.mxu0 0.0
    %198 = vmatprep.subr.mxu0 0.0
    %199 = vmatpush1.msra.mxu0 0.0
    %200 = vmatprep.subr.mxu0 0.0
    %201 = vmatpush1.msra.mxu0 0.0
    %202 = vmatprep.subr.mxu0 0.0
    %203 = vmatpush1.msra.mxu0 0.0
    %204 = vmatprep.subr.mxu0 0.0
    %205 = vmatpush1.msra.mxu0 0.0
    %206 = vmatprep.subr.mxu0 0.0
    %207 = vmatpush1.msra.mxu0 0.0
    %208 = vmatprep.subr.mxu0 0.0
    %209 = vmatpush1.msra.mxu0 0.0
    %210 = vmatprep.subr.mxu0 0.0
    %211 = vmatpush1.msra.mxu0 0.0
    %212 = vmatprep.subr.mxu0 0.0
    %213 = vmatpush1.msra.mxu0 0.0
    %214 = vmatprep.subr.mxu0 0.0
    %215 = vmatpush1.msra.mxu0 0.0
    %216 = vmatprep.subr.mxu0 0.0
    %217 = vmatpush1.msra.mxu0 0.0
    %218 = vmatprep.subr.mxu0 0.0
    %219 = vmatpush1.msra.mxu0 0.0
    %220 = vmatprep.mubr.f32.mxu0 0.0
    %v221 = vand.u32 %v55, 4294901760
    %222 = vmatmul.mubr.f32.gmra.mrb[0].mxu0 %v221
    %v223 = vpop.f32.mrb[0].mxu0
    %v224 = vadd.f32 %v133, %v223
    %v225 = vpop.f32.mrb[0].mxu0
    %226 = vdwg.mxu0
    %227 = vmatprep.subr.mxu0 0.0
    %v228 = vand.u32 %v42, 4294901760
    %v229 = vsub.f32 %v42, %v228
    %230 = vmatpush1.msra.mxu0 %v229
    %231 = vmatprep.subr.mxu0 0.0
    %v232 = vand.u32 %v43, 4294901760
    %v233 = vsub.f32 %v43, %v232
    %234 = vmatpush1.msra.mxu0 %v233
    %235 = vmatprep.subr.mxu0 0.0
    %v236 = vand.u32 %v44, 4294901760
    %v237 = vsub.f32 %v44, %v236
    %238 = vmatpush1.msra.mxu0 %v237
    %239 = vmatprep.subr.mxu0 0.0
    %v240 = vand.u32 %v45, 4294901760
    %v241 = vsub.f32 %v45, %v240
    %242 = vmatpush1.msra.mxu0 %v241
    %243 = vmatprep.subr.mxu0 0.0
    %244 = vmatpush1.msra.mxu0 0.0
    %245 = vmatprep.subr.mxu0 0.0
    %246 = vmatpush1.msra.mxu0 0.0
    %247 = vmatprep.subr.mxu0 0.0
    %248 = vmatpush1.msra.mxu0 0.0
    %249 = vmatprep.subr.mxu0 0.0
    %250 = vmatpush1.msra.mxu0 0.0
    %251 = vmatprep.subr.mxu0 0.0
    %252 = vmatpush1.msra.mxu0 0.0
    %253 = vmatprep.subr.mxu0 0.0
    %254 = vmatpush1.msra.mxu0 0.0
    %255 = vmatprep.subr.mxu0 0.0
    %256 = vmatpush1.msra.mxu0 0.0
    %257 = vmatprep.subr.mxu0 0.0
    %258 = vmatpush1.msra.mxu0 0.0
    %259 = vmatprep.subr.mxu0 0.0
    %260 = vmatpush1.msra.mxu0 0.0
    %261 = vmatprep.subr.mxu0 0.0
    %262 = vmatpush1.msra.mxu0 0.0
    %263 = vmatprep.subr.mxu0 0.0
    %264 = vmatpush1.msra.mxu0 0.0
    %265 = vmatprep.subr.mxu0 0.0
    %266 = vmatpush1.msra.mxu0 0.0
    %267 = vmatprep.subr.mxu0 0.0
    %268 = vmatpush1.msra.mxu0 0.0
    %269 = vmatprep.subr.mxu0 0.0
    %270 = vmatpush1.msra.mxu0 0.0
    %271 = vmatprep.subr.mxu0 0.0
    %272 = vmatpush1.msra.mxu0 0.0
    %273 = vmatprep.subr.mxu0 0.0
    %274 = vmatpush1.msra.mxu0 0.0
    %275 = vmatprep.subr.mxu0 0.0
    %276 = vmatpush1.msra.mxu0 0.0
    %277 = vmatprep.subr.mxu0 0.0
    %278 = vmatpush1.msra.mxu0 0.0
    %279 = vmatprep.subr.mxu0 0.0
    %280 = vmatpush1.msra.mxu0 0.0
    %281 = vmatprep.subr.mxu0 0.0
    %282 = vmatpush1.msra.mxu0 0.0
    %283 = vmatprep.subr.mxu0 0.0
    %284 = vmatpush1.msra.mxu0 0.0
    %285 = vmatprep.subr.mxu0 0.0
    %286 = vmatpush1.msra.mxu0 0.0
    %287 = vmatprep.subr.mxu0 0.0
    %288 = vmatpush1.msra.mxu0 0.0
    %289 = vmatprep.subr.mxu0 0.0
    %290 = vmatpush1.msra.mxu0 0.0
    %291 = vmatprep.subr.mxu0 0.0
    %292 = vmatpush1.msra.mxu0 0.0
    %293 = vmatprep.subr.mxu0 0.0
    %294 = vmatpush1.msra.mxu0 0.0
    %295 = vmatprep.subr.mxu0 0.0
    %296 = vmatpush1.msra.mxu0 0.0
    %297 = vmatprep.subr.mxu0 0.0
    %298 = vmatpush1.msra.mxu0 0.0
    %299 = vmatprep.mubr.f32.mxu0 0.0
    %v300 = vand.u32 %v55, 4294901760
    %v301 = vsub.f32 %v55, %v300
    %302 = vmatmul.mubr.f32.gmra.mrb[0].mxu0 %v301
    %v303 = vpop.f32.mrb[0].mxu0
    %v304 = vadd.f32 %v224, %v303
    %v305 = vpop.f32.mrb[0].mxu0
    %306 = vdwg.mxu0
    %307 = vmatprep.subr.mxu0 0.0
    %v308 = vand.u32 %v42, 4294901760
    %309 = vmatpush1.msra.mxu0 %v308
    %310 = vmatprep.subr.mxu0 0.0
    %v311 = vand.u32 %v43, 4294901760
    %312 = vmatpush1.msra.mxu0 %v311
    %313 = vmatprep.subr.mxu0 0.0
    %v314 = vand.u32 %v44, 4294901760
    %315 = vmatpush1.msra.mxu0 %v314
    %316 = vmatprep.subr.mxu0 0.0
    %v317 = vand.u32 %v45, 4294901760
    %318 = vmatpush1.msra.mxu0 %v317
    %319 = vmatprep.subr.mxu0 0.0
    %320 = vmatpush1.msra.mxu0 0.0
    %321 = vmatprep.subr.mxu0 0.0
    %322 = vmatpush1.msra.mxu0 0.0
    %323 = vmatprep.subr.mxu0 0.0
    %324 = vmatpush1.msra.mxu0 0.0
    %325 = vmatprep.subr.mxu0 0.0
    %326 = vmatpush1.msra.mxu0 0.0
    %327 = vmatprep.subr.mxu0 0.0
    %328 = vmatpush1.msra.mxu0 0.0
    %329 = vmatprep.subr.mxu0 0.0
    %330 = vmatpush1.msra.mxu0 0.0
    %331 = vmatprep.subr.mxu0 0.0
    %332 = vmatpush1.msra.mxu0 0.0
    %333 = vmatprep.subr.mxu0 0.0
    %334 = vmatpush1.msra.mxu0 0.0
    %335 = vmatprep.subr.mxu0 0.0
    %336 = vmatpush1.msra.mxu0 0.0
    %337 = vmatprep.subr.mxu0 0.0
    %338 = vmatpush1.msra.mxu0 0.0
    %339 = vmatprep.subr.mxu0 0.0
    %340 = vmatpush1.msra.mxu0 0.0
    %341 = vmatprep.subr.mxu0 0.0
    %342 = vmatpush1.msra.mxu0 0.0
    %343 = vmatprep.subr.mxu0 0.0
    %344 = vmatpush1.msra.mxu0 0.0
    %345 = vmatprep.subr.mxu0 0.0
    %346 = vmatpush1.msra.mxu0 0.0
    %347 = vmatprep.subr.mxu0 0.0
    %348 = vmatpush1.msra.mxu0 0.0
    %349 = vmatprep.subr.mxu0 0.0
    %350 = vmatpush1.msra.mxu0 0.0
    %351 = vmatprep.subr.mxu0 0.0
    %352 = vmatpush1.msra.mxu0 0.0
    %353 = vmatprep.subr.mxu0 0.0
    %354 = vmatpush1.msra.mxu0 0.0
    %355 = vmatprep.subr.mxu0 0.0
    %356 = vmatpush1.msra.mxu0 0.0
    %357 = vmatprep.subr.mxu0 0.0
    %358 = vmatpush1.msra.mxu0 0.0
    %359 = vmatprep.subr.mxu0 0.0
    %360 = vmatpush1.msra.mxu0 0.0
    %361 = vmatprep.subr.mxu0 0.0
    %362 = vmatpush1.msra.mxu0 0.0
    %363 = vmatprep.subr.mxu0 0.0
    %364 = vmatpush1.msra.mxu0 0.0
    %365 = vmatprep.subr.mxu0 0.0
    %366 = vmatpush1.msra.mxu0 0.0
    %367 = vmatprep.subr.mxu0 0.0
    %368 = vmatpush1.msra.mxu0 0.0
    %369 = vmatprep.subr.mxu0 0.0
    %370 = vmatpush1.msra.mxu0 0.0
    %371 = vmatprep.subr.mxu0 0.0
    %372 = vmatpush1.msra.mxu0 0.0
    %373 = vmatprep.subr.mxu0 0.0
    %374 = vmatpush1.msra.mxu0 0.0
    %375 = vmatprep.mubr.f32.mxu0 0.0
    %v376 = vand.u32 %v55, 4294901760
    %v377 = vsub.f32 %v55, %v376
    %v378 = vand.u32 %v377, 4294901760
    %379 = vmatmul.mubr.f32.gmra.mrb[0].mxu0 %v378
    %v380 = vpop.f32.mrb[0].mxu0
    %v381 = vadd.f32 %v304, %v380
    %v382 = vpop.f32.mrb[0].mxu0
    %383 = vdwg.mxu0
    %384 = vmatprep.subr.mxu0 0.0
    %v385 = vand.u32 %v42, 4294901760
    %v386 = vsub.f32 %v42, %v385
    %v387 = vand.u32 %v386, 4294901760
    %388 = vmatpush1.msra.mxu0 %v387
    %389 = vmatprep.subr.mxu0 0.0
    %v390 = vand.u32 %v43, 4294901760
    %v391 = vsub.f32 %v43, %v390
    %v392 = vand.u32 %v391, 4294901760
    %393 = vmatpush1.msra.mxu0 %v392
    %394 = vmatprep.subr.mxu0 0.0
    %v395 = vand.u32 %v44, 4294901760
    %v396 = vsub.f32 %v44, %v395
    %v397 = vand.u32 %v396, 4294901760
    %398 = vmatpush1.msra.mxu0 %v397
    %399 = vmatprep.subr.mxu0 0.0
    %v400 = vand.u32 %v45, 4294901760
    %v401 = vsub.f32 %v45, %v400
    %v402 = vand.u32 %v401, 4294901760
    %403 = vmatpush1.msra.mxu0 %v402
    %404 = vmatprep.subr.mxu0 0.0
    %405 = vmatpush1.msra.mxu0 0.0
    %406 = vmatprep.subr.mxu0 0.0
    %407 = vmatpush1.msra.mxu0 0.0
    %408 = vmatprep.subr.mxu0 0.0
    %409 = vmatpush1.msra.mxu0 0.0
    %410 = vmatprep.subr.mxu0 0.0
    %411 = vmatpush1.msra.mxu0 0.0
    %412 = vmatprep.subr.mxu0 0.0
    %413 = vmatpush1.msra.mxu0 0.0
    %414 = vmatprep.subr.mxu0 0.0
    %415 = vmatpush1.msra.mxu0 0.0
    %416 = vmatprep.subr.mxu0 0.0
    %417 = vmatpush1.msra.mxu0 0.0
    %418 = vmatprep.subr.mxu0 0.0
    %419 = vmatpush1.msra.mxu0 0.0
    %420 = vmatprep.subr.mxu0 0.0
    %421 = vmatpush1.msra.mxu0 0.0
    %422 = vmatprep.subr.mxu0 0.0
    %423 = vmatpush1.msra.mxu0 0.0
    %424 = vmatprep.subr.mxu0 0.0
    %425 = vmatpush1.msra.mxu0 0.0
    %426 = vmatprep.subr.mxu0 0.0
    %427 = vmatpush1.msra.mxu0 0.0
    %428 = vmatprep.subr.mxu0 0.0
    %429 = vmatpush1.msra.mxu0 0.0
    %430 = vmatprep.subr.mxu0 0.0
    %431 = vmatpush1.msra.mxu0 0.0
    %432 = vmatprep.subr.mxu0 0.0
    %433 = vmatpush1.msra.mxu0 0.0
    %434 = vmatprep.subr.mxu0 0.0
    %435 = vmatpush1.msra.mxu0 0.0
    %436 = vmatprep.subr.mxu0 0.0
    %437 = vmatpush1.msra.mxu0 0.0
    %438 = vmatprep.subr.mxu0 0.0
    %439 = vmatpush1.msra.mxu0 0.0
    %440 = vmatprep.subr.mxu0 0.0
    %441 = vmatpush1.msra.mxu0 0.0
    %442 = vmatprep.subr.mxu0 0.0
    %443 = vmatpush1.msra.mxu0 0.0
    %444 = vmatprep.subr.mxu0 0.0
    %445 = vmatpush1.msra.mxu0 0.0
    %446 = vmatprep.subr.mxu0 0.0
    %447 = vmatpush1.msra.mxu0 0.0
    %448 = vmatprep.subr.mxu0 0.0
    %449 = vmatpush1.msra.mxu0 0.0
    %450 = vmatprep.subr.mxu0 0.0
    %451 = vmatpush1.msra.mxu0 0.0
    %452 = vmatprep.subr.mxu0 0.0
    %453 = vmatpush1.msra.mxu0 0.0
    %454 = vmatprep.subr.mxu0 0.0
    %455 = vmatpush1.msra.mxu0 0.0
    %456 = vmatprep.subr.mxu0 0.0
    %457 = vmatpush1.msra.mxu0 0.0
    %458 = vmatprep.subr.mxu0 0.0
    %459 = vmatpush1.msra.mxu0 0.0
    %460 = vmatprep.mubr.f32.mxu0 0.0
    %v461 = vand.u32 %v55, 4294901760
    %462 = vmatmul.mubr.f32.gmra.mrb[0].mxu0 %v461
    %v463 = vpop.f32.mrb[0].mxu0
    %v464 = vadd.f32 %v381, %v463
    %v465 = vpop.f32.mrb[0].mxu0
    %466 = vdwg.mxu0
    %467 = vmatprep.subr.mxu0 0.0
    %v468 = vand.u32 %v42, 4294901760
    %469 = vmatpush1.msra.mxu0 %v468
    %470 = vmatprep.subr.mxu0 0.0
    %v471 = vand.u32 %v43, 4294901760
    %472 = vmatpush1.msra.mxu0 %v471
    %473 = vmatprep.subr.mxu0 0.0
    %v474 = vand.u32 %v44, 4294901760
    %475 = vmatpush1.msra.mxu0 %v474
    %476 = vmatprep.subr.mxu0 0.0
    %v477 = vand.u32 %v45, 4294901760
    %478 = vmatpush1.msra.mxu0 %v477
    %479 = vmatprep.subr.mxu0 0.0
    %480 = vmatpush1.msra.mxu0 0.0
    %481 = vmatprep.subr.mxu0 0.0
    %482 = vmatpush1.msra.mxu0 0.0
    %483 = vmatprep.subr.mxu0 0.0
    %484 = vmatpush1.msra.mxu0 0.0
    %485 = vmatprep.subr.mxu0 0.0
    %486 = vmatpush1.msra.mxu0 0.0
    %487 = vmatprep.subr.mxu0 0.0
    %488 = vmatpush1.msra.mxu0 0.0
    %489 = vmatprep.subr.mxu0 0.0
    %490 = vmatpush1.msra.mxu0 0.0
    %491 = vmatprep.subr.mxu0 0.0
    %492 = vmatpush1.msra.mxu0 0.0
    %493 = vmatprep.subr.mxu0 0.0
    %494 = vmatpush1.msra.mxu0 0.0
    %495 = vmatprep.subr.mxu0 0.0
    %496 = vmatpush1.msra.mxu0 0.0
    %497 = vmatprep.subr.mxu0 0.0
    %498 = vmatpush1.msra.mxu0 0.0
    %499 = vmatprep.subr.mxu0 0.0
    %500 = vmatpush1.msra.mxu0 0.0
    %501 = vmatprep.subr.mxu0 0.0
    %502 = vmatpush1.msra.mxu0 0.0
    %503 = vmatprep.subr.mxu0 0.0
    %504 = vmatpush1.msra.mxu0 0.0
    %505 = vmatprep.subr.mxu0 0.0
    %506 = vmatpush1.msra.mxu0 0.0
    %507 = vmatprep.subr.mxu0 0.0
    %508 = vmatpush1.msra.mxu0 0.0
    %509 = vmatprep.subr.mxu0 0.0
    %510 = vmatpush1.msra.mxu0 0.0
    %511 = vmatprep.subr.mxu0 0.0
    %512 = vmatpush1.msra.mxu0 0.0
    %513 = vmatprep.subr.mxu0 0.0
    %514 = vmatpush1.msra.mxu0 0.0
    %515 = vmatprep.subr.mxu0 0.0
    %516 = vmatpush1.msra.mxu0 0.0
    %517 = vmatprep.subr.mxu0 0.0
    %518 = vmatpush1.msra.mxu0 0.0
    %519 = vmatprep.subr.mxu0 0.0
    %520 = vmatpush1.msra.mxu0 0.0
    %521 = vmatprep.subr.mxu0 0.0
    %522 = vmatpush1.msra.mxu0 0.0
    %523 = vmatprep.subr.mxu0 0.0
    %524 = vmatpush1.msra.mxu0 0.0
    %525 = vmatprep.subr.mxu0 0.0
    %526 = vmatpush1.msra.mxu0 0.0
    %527 = vmatprep.subr.mxu0 0.0
    %528 = vmatpush1.msra.mxu0 0.0
    %529 = vmatprep.subr.mxu0 0.0
    %530 = vmatpush1.msra.mxu0 0.0
    %531 = vmatprep.subr.mxu0 0.0
    %532 = vmatpush1.msra.mxu0 0.0
    %533 = vmatprep.subr.mxu0 0.0
    %534 = vmatpush1.msra.mxu0 0.0
    %535 = vmatprep.mubr.f32.mxu0 0.0
    %v536 = vand.u32 %v55, 4294901760
    %537 = vmatmul.mubr.f32.gmra.mrb[0].mxu0 %v536
    %v538 = vpop.f32.mrb[0].mxu0
    %v539 = vadd.f32 %v464, %v538
    %v540 = vpop.f32.mrb[0].mxu0
    %541 = vdwg.mxu0
    %v542 = vtanh.pop %v539
    %vm543 = vcmask 254976
    %544 = vst.msk [vmem:[#allocation7] sm:$0x3] %vm543, %v542
    // Predicated region
    $region22: #{tpu_custom_call.1} parent=1 // pred_check
      _
    $region23: #{tpu_custom_call.1} parent=1 // pred_check_branch
      %546 = sbr.rel (0) target = $region25
    $region24: #{tpu_custom_call.1} parent=1 // pred_region
      %s548 = ssub.s32 32, 32
      %549 = vsyncadd [#allocation4], %s548
      %s551 = sshll.u32 [#allocation7], 4
      %s552 = int_to_ptr.vmem [resolvable:$true] %s551
      %554 = dma.vmem_to_hbm [thread:$0]  %s552, 32, %s3, [#allocation4]
    $region25: #{tpu_custom_call.1} parent=1 // pred_fallthru
      _
    // Predicated region
    $region26: #{tpu_custom_call.1} parent=1 // pred_check
      _
    $region27: #{tpu_custom_call.1} parent=1 // pred_check_branch
      %556 = sbr.rel (0) target = $region29
    $region28: #{tpu_custom_call.1} parent=1 // pred_region
      %557 = dma.done [#allocation4], 32
    $region29: #{tpu_custom_call.1} parent=1 // pred_fallthru
      _
    %558 = vsyncpa [#allocation3], 1
    %559 = vsyncpa [#allocation6], 1
    %560 = vsyncpa [#allocation4], 1

</llo_original>
